<compile_context>
chip_gen: v5e
topology: v5e:2x2
jax: 0.10.0
libtpu: 0.0.40
codegen_flags: <defaults>
</compile_context>

<pallas_src>
import math
import functools

import jax
import jax.numpy as jnp
from jax import lax
from jax.experimental import pallas as pl
from jax.experimental.pallas import tpu as pltpu


def _round_up(a: int, b: int) -> int:
    return ((a + b - 1) // b) * b


def _largest_divisor_tile(dim: int, max_tile: int, align: int) -> int:
    """Largest multiple of `align` that divides `dim` and is <= max_tile.

    `dim` must itself be a multiple of `align`; falls back to `align`.
    """
    assert dim % align == 0
    units = dim // align
    best = align
    for d in range(1, units + 1):
        if units % d == 0 and d * align <= max_tile:
            best = d * align
    return best


# ---------------------------------------------------------------------------
# Kernels
# ---------------------------------------------------------------------------
def _mm_bias_kernel_single(x_ref, w_ref, b_ref, o_ref):
    """Single K step: no scratch accumulator, write the output tile directly."""
    acc = lax.dot_general(
        x_ref[...], w_ref[...],
        dimension_numbers=(((1,), (1,)), ((), ())),   # contract on K of both
        preferred_element_type=jnp.float32)           # (tb, tn) f32
    o_ref[...] = (acc + b_ref[...]).astype(o_ref.dtype)


def _mm_bias_kernel_acc(x_ref, w_ref, b_ref, o_ref, acc_ref):
    """K-split reduction with f32 VMEM accumulator (init / finalize via pl.when)."""
    k = pl.program_id(2)

    @pl.when(k == 0)
    def _init():
        acc_ref[...] = jnp.zeros_like(acc_ref)

    acc_ref[...] += lax.dot_general(
        x_ref[...], w_ref[...],
        dimension_numbers=(((1,), (1,)), ((), ())),
        preferred_element_type=jnp.float32)

    @pl.when(k == pl.num_programs(2) - 1)
    def _finalize():
        o_ref[...] = (acc_ref[...] + b_ref[...]).astype(o_ref.dtype)


# ---------------------------------------------------------------------------
# pallas_call wrapper (padded, pre-masked operands)
# ---------------------------------------------------------------------------
def _pallas_masked_matmul(xp, wmp, bp, out_dtype, tb, tn, tk):
    """xp: (Bp, Kp) compute dtype; wmp: (Np, Kp) compute dtype; bp: (1, Np) f32."""
    Bp, Kp = xp.shape
    Np = wmp.shape[0]
    nk = Kp // tk

    cd_bytes = jnp.dtype(xp.dtype).itemsize
    out_bytes = jnp.dtype(out_dtype).itemsize
    # Double-buffered inputs/outputs + f32 accumulator + bias slice.
    working = (2 * (tb * tk + tn * tk) * cd_bytes
               + 2 * tb * tn * out_bytes
               + tb * tn * 4
               + 2 * tn * 4)
    # Leave headroom; cap below v7x's 64 MiB physical VMEM.
    vmem_limit = int(min(max(2 * working, 32 * 1024 * 1024), 48 * 1024 * 1024))

    cost = pl.CostEstimate(
        flops=2 * Bp * Np * Kp,
        transcendentals=0,
        bytes_accessed=(Bp * Kp + Np * Kp) * cd_bytes + Bp * Np * out_bytes)

    if nk == 1:
        grid = (Bp // tb, Np // tn)
        return pl.pallas_call(
            _mm_bias_kernel_single,
            out_shape=jax.ShapeDtypeStruct((Bp, Np), out_dtype),
            grid_spec=pltpu.PrefetchScalarGridSpec(
                num_scalar_prefetch=0,
                grid=grid,
                in_specs=[
                    pl.BlockSpec((tb, Kp), lambda i, j: (i, 0)),   # x tile
                    pl.BlockSpec((tn, Kp), lambda i, j: (j, 0)),   # masked weight
                    pl.BlockSpec((1, tn), lambda i, j: (0, j)),    # bias slice
                ],
                out_specs=pl.BlockSpec((tb, tn), lambda i, j: (i, j)),
            ),
            compiler_params=pltpu.CompilerParams(
                dimension_semantics=("parallel", "parallel"),
                vmem_limit_bytes=vmem_limit),
            cost_estimate=cost,
        )(xp, wmp, bp)

    grid = (Bp // tb, Np // tn, nk)
    return pl.pallas_call(
        _mm_bias_kernel_acc,
        out_shape=jax.ShapeDtypeStruct((Bp, Np), out_dtype),
        grid_spec=pltpu.PrefetchScalarGridSpec(
            num_scalar_prefetch=0,
            grid=grid,
            in_specs=[
                pl.BlockSpec((tb, tk), lambda i, j, k: (i, k)),    # x tile
                pl.BlockSpec((tn, tk), lambda i, j, k: (j, k)),    # masked weight
                pl.BlockSpec((1, tn), lambda i, j, k: (0, j)),     # bias slice
            ],
            out_specs=pl.BlockSpec((tb, tn), lambda i, j, k: (i, j)),
            scratch_shapes=[pltpu.VMEM((tb, tn), jnp.float32)],
        ),
        compiler_params=pltpu.CompilerParams(
            dimension_semantics=("parallel", "parallel", "arbitrary"),
            vmem_limit_bytes=vmem_limit),
        cost_estimate=cost,
    )(xp, wmp, bp)


# ---------------------------------------------------------------------------
# Public API
# ---------------------------------------------------------------------------
def make_masked_linear(weight, mask, bias=None, *,
                       compute_dtype=jnp.bfloat16, tb=256, tn=256, tk=512):
    """Factory mirroring CustomizedLinear.forward.

    Pre-masks, pads and casts the weight exactly once (weights/mask are static
    across calls), then returns a jitted `forward(x) -> (B, N)` closure.

    weight, mask: (N, K) = (out_features, in_features); bias: (N,) or None.
    """
    N, K = weight.shape
    assert mask.shape == (N, K)

    # Mask multiply once, in f32 (v5e VPU has no bf16 VALU), then cast.
    wm = weight.astype(jnp.float32) * mask.astype(jnp.float32)

    # Lane-align K and N (padding with zeros is exact for the contraction;
    # padded N columns are sliced off after the kernel).
    Kp = _round_up(max(K, 128), 128)
    Np = _round_up(max(N, 128), 128)
    wmp = jnp.pad(wm, ((0, Np - N), (0, Kp - K))).astype(compute_dtype)

    if bias is None:
        bp = jnp.zeros((1, Np), jnp.float32)
    else:
        bp = jnp.pad(bias.astype(jnp.float32), (0, Np - N)).reshape(1, Np)

    # Tiles = largest aligned divisors of the padded dims (no over-padding).
    tk_c = _largest_divisor_tile(Kp, tk, 128)
    tn_c = _largest_divisor_tile(Np, tn, 128)

    @jax.jit
    def forward(x):
        B, Kx = x.shape
        assert Kx == K, f"expected in_features={K}, got {Kx}"
        Bp = _round_up(max(B, 8), 8)
        tb_c = _largest_divisor_tile(Bp, tb, 8)

        # Keep >=2 blocks along a parallel axis so v7x's 2 TensorCores can
        # both be fed when the batch collapses to a single block.
        tn_use = tn_c
        if Bp // tb_c == 1 and Np // tn_use == 1 and Np >= 256:
            tn_use = _largest_divisor_tile(Np, Np // 2, 128)

        xp = x if (Bp, Kp) == (B, K) else jnp.pad(x, ((0, Bp - B), (0, Kp - K)))
        xp = xp.astype(compute_dtype)

        out = _pallas_masked_matmul(xp, wmp, bp, x.dtype, tb_c, tn_use, tk_c)
        return out[:B, :N]

    return forward


def masked_linear(x, weight, mask, bias=None, **kwargs):
    """One-shot convenience wrapper (prefer make_masked_linear to cache the
    pre-masked/padded weight across calls)."""
    return make_masked_linear(weight, mask, bias, **kwargs)(x)


# TODO(synk): backward pass (custom autograd masking of grad_weight) not implemented here.


if __name__ == "__main__":
    # Small shapes consistent with the module: in_features=32, out_features=32, batch=8.
    B, K, N = 8, 32, 32
    key = jax.random.PRNGKey(0)
    k_mask, k_w, k_b, k_x = jax.random.split(key, 4)

    # mask given as (n_input_feature, n_output_feature) = (K, N), 0/1 entries,
    # then transposed to (N, K) exactly like the PyTorch module does.
    mask_in = (jax.random.uniform(k_mask, (K, N)) > 0.5).astype(jnp.float32)
    mask = mask_in.T                                               # (N, K)

    # Deterministic parameter init mirroring reset_parameters():
    # uniform(-stdv, stdv), stdv = 1/sqrt(in_features); weight pre-masked at init.
    stdv = 1.0 / math.sqrt(K)
    weight = jax.random.uniform(k_w, (N, K), minval=-stdv, maxval=stdv).astype(jnp.float32)
    weight = weight * mask
    bias = jax.random.uniform(k_b, (N,), minval=-stdv, maxval=stdv).astype(jnp.float32)

    x = jax.random.normal(k_x, (B, K), dtype=jnp.float32)

    layer = make_masked_linear(weight, mask, bias)   # pre-masks/pads weight once
    out = jax.block_until_ready(layer(x))

    # Reference in plain JAX (f32). bf16 operands + f32 accumulation -> loose tol.
    ref = x @ (weight * mask).T + bias[None, :]
    assert out.shape == (B, N)
    assert out.dtype == x.dtype
    assert jnp.allclose(out, ref, atol=3e-2, rtol=3e-2)
    print("KERNEL_OK")
</pallas_src>

<mosaic_0001>
module attributes {stable_mosaic.version = 11 : i64} {
  func.func @_mm_bias_kernel_single(%arg0: i32, %arg1: i32, %arg2: memref<8x128xbf16, #tpu.memory_space<vmem>>, %arg3: memref<128x128xbf16, #tpu.memory_space<vmem>>, %arg4: memref<1x128xf32, #tpu.memory_space<vmem>>, %arg5: memref<8x128xf32, #tpu.memory_space<vmem>>) attributes {dimension_semantics = [#tpu.dimension_semantics<parallel>, #tpu.dimension_semantics<parallel>], iteration_bounds = array<i64: 1, 1>, scalar_prefetch = 0 : i64, scratch_operands = 0 : i64, tpu.core_type = #tpu.core_type<tc>, window_params = [{transform_indices = @transform_0, window_bounds = array<i64: 8, 128>}, {transform_indices = @transform_1, window_bounds = array<i64: 128, 128>}, {transform_indices = @transform_2, window_bounds = array<i64: 1, 128>}, {transform_indices = @transform_3, window_bounds = array<i64: 8, 128>}]} {
    %c0 = arith.constant 0 : index
    %c0_0 = arith.constant 0 : index
    %0 = vector.load %arg2[%c0, %c0_0] : memref<8x128xbf16, #tpu.memory_space<vmem>>, vector<8x128xbf16>
    %c0_1 = arith.constant 0 : index
    %c0_2 = arith.constant 0 : index
    %1 = vector.load %arg3[%c0_1, %c0_2] : memref<128x128xbf16, #tpu.memory_space<vmem>>, vector<128x128xbf16>
    %cst = arith.constant dense<0.000000e+00> : vector<8x128xf32>
    %2 = tpu.matmul %0, %1, %cst {dimension_numbers = #tpu.dot_dimension_numbers<[1], [1], [0], [0], [0, 0, 1, 0], [], []>} : vector<8x128xbf16>, vector<128x128xbf16>, vector<8x128xf32> -> vector<8x128xf32>
    %c0_3 = arith.constant 0 : index
    %c0_4 = arith.constant 0 : index
    %3 = vector.load %arg4[%c0_3, %c0_4] : memref<1x128xf32, #tpu.memory_space<vmem>>, vector<1x128xf32>
    %4 = vector.broadcast %3 : vector<1x128xf32> to vector<8x128xf32>
    %5 = arith.addf %2, %4 : vector<8x128xf32>
    %c0_5 = arith.constant 0 : index
    %c0_6 = arith.constant 0 : index
    %6 = vector.load %arg5[%c0_5, %c0_6] : memref<8x128xf32, #tpu.memory_space<vmem>>, vector<8x128xf32>
    tpu.vector_store %arg5[%c0_5, %c0_6], %5 {strides = array<i32>} : memref<8x128xf32, #tpu.memory_space<vmem>>, vector<8x128xf32>,
    return
  }
  func.func @transform_0(%arg0: i32, %arg1: i32) -> (i32, i32) {
    %c0_i32 = arith.constant 0 : i32
    %c0_i32_0 = arith.constant 0 : i32
    return %arg0, %c0_i32 : i32, i32
  }
  func.func @transform_1(%arg0: i32, %arg1: i32) -> (i32, i32) {
    %c0_i32 = arith.constant 0 : i32
    %c0_i32_0 = arith.constant 0 : i32
    return %arg1, %c0_i32 : i32, i32
  }
  func.func @transform_2(%arg0: i32, %arg1: i32) -> (i32, i32) {
    %c0_i32 = arith.constant 0 : i32
    %c0_i32_0 = arith.constant 0 : i32
    return %c0_i32, %arg1 : i32, i32
  }
  func.func @transform_3(%arg0: i32, %arg1: i32) -> (i32, i32) {
    %c0_i32 = arith.constant 0 : i32
    return %arg0, %arg1 : i32, i32
  }
}

</mosaic_0001>

<llo_original>
// kernel: forward.1
$region0: #{forward.1}
  #allocation0 [shape = 'u32[]', space=smem, size = 0x4, offset = 0x4, fixed_abs, tag = 'smem constant byte address 0x4 - core index']
  #allocation1 [shape = 'u32[72,128]{1,0:T(1,128)}', space=vmem, size = 0x9000, scoped, tag = 'internal scratch']
  %s0 = inlined_call_operand.vmem [shape: bf16[8,128], index: 0, kind: input, shape index: {}]
  %s1 = inlined_call_operand.hbm [shape: bf16[128,128], index: 1, kind: input, shape index: {}]
  %s2 = inlined_call_operand.vmem [shape: f32[1,128], index: 2, kind: input, shape index: {}]
  %s3 = inlined_call_operand.hbm [shape: f32[8,128], index: 3, kind: output, shape index: {}]
  %s4 = sld [smem:[#allocation0]]
  $region26: #{forward.1} parent=0
    _
  %s6 = ssub.s32 1, %s4
  %s7 = scalar_select 0, %s6, %s4
  $region1: #{forward.1} parent=0
    #allocation2 [shape = 'u8[32768]{0}', space=vmem, size = 0x8000, scoped, tag = 'input window, operand 1, single buffered']
    #allocation3 [shape = 's32[1]{0}', space=sflag, size = 0x4, scoped, tag = 'scoped memory for forward.1']
    #allocation4 [shape = 's32[1]{0}', space=sflag, size = 0x4, scoped, tag = 'scoped memory for forward.1']
    #allocation5 [shape = 'u8[4096]{0}', space=vmem, size = 0x1000, scoped, tag = 'output window, operand 0, single buffered']
    %8 = vsyncpa [#allocation3], 0
    %9 = vsyncpa [#allocation4], 0
    // Predicated region
    $region2: #{forward.1} parent=1 // pred_check
      _
    $region3: #{forward.1} parent=1 // pred_check_branch
      %11 = sbr.rel (0) target = $region5
    $region4: #{forward.1} parent=1 // pred_region
      _
    $region5: #{forward.1} parent=1 // pred_fallthru
      _
    // Predicated region
    $region6: #{forward.1} parent=1 // pred_check
      _
    $region7: #{forward.1} parent=1 // pred_check_branch
      %13 = sbr.rel (0) target = $region9
    $region8: #{forward.1} parent=1 // pred_region
      %15 = vsyncadd [#allocation3], 0
      %s16 = sshll.u32 %s1, 4
      %s17 = int_to_ptr.hbm [resolvable:$true] %s16
      %s18 = sshll.u32 [#allocation2], 4
      %s19 = int_to_ptr.vmem [resolvable:$true] %s18
      %24 = dma.hbm_to_vmem [thread:$0]  %s17, 1024, %s19, [#allocation3], 64, 64, 4
    $region9: #{forward.1} parent=1 // pred_fallthru
      _
    // Predicated region
    $region10: #{forward.1} parent=1 // pred_check
      _
    $region11: #{forward.1} parent=1 // pred_check_branch
      %26 = sbr.rel (0) target = $region13
    $region12: #{forward.1} parent=1 // pred_region
      _
    $region13: #{forward.1} parent=1 // pred_fallthru
      _
    // Predicated region
    $region14: #{forward.1} parent=1 // pred_check
      _
    $region15: #{forward.1} parent=1 // pred_check_branch
      %28 = sbr.rel (0) target = $region17
    $region16: #{forward.1} parent=1 // pred_region
      %30 = dma.done [#allocation3], 1024
    $region17: #{forward.1} parent=1 // pred_fallthru
      _
    %v31 = vld [vmem:[%s0] sm:$0xf]
    %v32 = vld [vmem:[#allocation2] sm:$0xf]
    %v33 = vld [vmem:[#allocation2 + $0x4] sm:$0xf]
    %v34 = vld [vmem:[#allocation2 + $0x8] sm:$0xf]
    %v35 = vld [vmem:[#allocation2 + $0xc] sm:$0xf]
    %v36 = vld [vmem:[#allocation2 + $0x10] sm:$0xf]
    %v37 = vld [vmem:[#allocation2 + $0x14] sm:$0xf]
    %v38 = vld [vmem:[#allocation2 + $0x18] sm:$0xf]
    %v39 = vld [vmem:[#allocation2 + $0x1c] sm:$0xf]
    %v40 = vld [vmem:[#allocation2 + $0x20] sm:$0xf]
    %v41 = vld [vmem:[#allocation2 + $0x24] sm:$0xf]
    %v42 = vld [vmem:[#allocation2 + $0x28] sm:$0xf]
    %v43 = vld [vmem:[#allocation2 + $0x2c] sm:$0xf]
    %v44 = vld [vmem:[#allocation2 + $0x30] sm:$0xf]
    %v45 = vld [vmem:[#allocation2 + $0x34] sm:$0xf]
    %v46 = vld [vmem:[#allocation2 + $0x38] sm:$0xf]
    %v47 = vld [vmem:[#allocation2 + $0x3c] sm:$0xf]
    %v48 = vld [vmem:[%s2] sm:$0x1]
    %v50 = vperm.slane %v48, 0
    %v68 = vunpack.c.l.b16 %v32
    %v69 = vunpack.c.l.b16 %v33
    %v70 = vunpack.c.l.b16 %v34
    %v71 = vunpack.c.l.b16 %v35
    %v72 = vunpack.c.l.b16 %v36
    %v73 = vunpack.c.l.b16 %v37
    %v74 = vunpack.c.l.b16 %v38
    %v75 = vunpack.c.l.b16 %v39
    %v76 = vunpack.c.l.b16 %v40
    %v77 = vunpack.c.l.b16 %v41
    %v78 = vunpack.c.l.b16 %v42
    %v79 = vunpack.c.l.b16 %v43
    %v80 = vunpack.c.l.b16 %v44
    %v81 = vunpack.c.l.b16 %v45
    %v82 = vunpack.c.l.b16 %v46
    %v83 = vunpack.c.l.b16 %v47
    %v84 = vpack.c.b16 %v69, %v68
    %v85 = vpack.c.b16 %v71, %v70
    %v86 = vpack.c.b16 %v73, %v72
    %v87 = vpack.c.b16 %v75, %v74
    %v88 = vpack.c.b16 %v77, %v76
    %v89 = vpack.c.b16 %v79, %v78
    %v90 = vpack.c.b16 %v81, %v80
    %v91 = vpack.c.b16 %v83, %v82
    %100 = vmatpush.bf16.xpose.msra.mxu0 %v91
    %101 = vmatpush.bf16.xpose.msra.mxu0 %v90
    %102 = vmatpush.bf16.xpose.msra.mxu0 %v89
    %103 = vmatpush.bf16.xpose.msra.mxu0 %v88
    %104 = vmatpush.bf16.xpose.msra.mxu0 %v87
    %105 = vmatpush.bf16.xpose.msra.mxu0 %v86
    %106 = vmatpush.bf16.xpose.msra.mxu0 %v85
    %107 = vmatpush.bf16.xpose.msra.mxu0 %v84
    %108 = vmatmul.bf16.gmra.mxu0 %v31
    %v109 = vpop.f32.mrf.mxu0
    %v110 = vadd.f32 %v50, %v109
    %v111 = vpop.f32.mrf.mxu0
    %112 = vdwg.mxu0
    %113 = vst [vmem:[#allocation5] sm:$0xff] %v110
    // Predicated region
    $region18: #{forward.1} parent=1 // pred_check
      _
    $region19: #{forward.1} parent=1 // pred_check_branch
      %115 = sbr.rel (0) target = $region21
    $region20: #{forward.1} parent=1 // pred_region
      %117 = vsyncadd [#allocation4], 0
      %s119 = sshll.u32 [#allocation5], 4
      %s120 = int_to_ptr.vmem [resolvable:$true] %s119
      %s121 = sshll.u32 %s3, 4
      %s122 = int_to_ptr.hbm [resolvable:$true] %s121
      %124 = dma.vmem_to_hbm [thread:$0]  %s120, 128, %s122, [#allocation4]
    $region21: #{forward.1} parent=1 // pred_fallthru
      _
    // Predicated region
    $region22: #{forward.1} parent=1 // pred_check
      _
    $region23: #{forward.1} parent=1 // pred_check_branch
      %126 = sbr.rel (0) target = $region25
    $region24: #{forward.1} parent=1 // pred_region
      %128 = dma.done [#allocation4], 128
    $region25: #{forward.1} parent=1 // pred_fallthru
      _
    %129 = vsyncpa [#allocation3], 1
    %130 = vsyncpa [#allocation4], 1

</llo_original>
